<compile_context>
chip_gen: v5e
topology: v5e:2x2
jax: 0.10.0
libtpu: 0.0.40
codegen_flags: <defaults>
</compile_context>

<pallas_src>
import jax
import jax.numpy as jnp
from jax.experimental import pallas as pl
from jax.experimental.pallas import tpu as pltpu

LANE = 128


def _round_up(x, m):
    return (x + m - 1) // m * m


def qnet_kernel(x_ref, w1_ref, b1_ref, w2_ref, b2_ref, o_ref):
    """One (TM, K) batch tile: out = relu(x @ W1 + b1) @ W2 + b2.

    Matmul inputs may be bf16 (MXU accumulates in f32); bias-add / ReLU in f32."""
    # hidden = relu(x @ W1 + b1)
    h = jnp.dot(x_ref[...], w1_ref[...], preferred_element_type=jnp.float32)
    h = jnp.maximum(h + b1_ref[...], 0.0)
    # out = hidden @ W2 + b2   (output last dim padded to 128 -> lane-dense store)
    o = jnp.dot(h.astype(w2_ref.dtype), w2_ref[...],
                preferred_element_type=jnp.float32)
    o_ref[...] = (o + b2_ref[...]).astype(o_ref.dtype)


def prepare_params(w1, b1, w2, b2, *, matmul_dtype=jnp.bfloat16):
    """One-time (init-time) parameter prep -- never do this per forward call.

    - weights kept in (in_features, out_features) layout (x @ W)
    - hidden/output feature dims zero-padded to multiples of 128 lanes
    - weights cast to `matmul_dtype` (bf16 for v6e/v7x MXU); biases stay f32.
    """
    in_size, hidden = w1.shape
    hidden2, out_size = w2.shape
    assert hidden == hidden2
    hp = _round_up(hidden, LANE)
    op = _round_up(out_size, LANE)

    w1p = jnp.zeros((in_size, hp), matmul_dtype).at[:, :hidden].set(
        w1.astype(matmul_dtype))
    b1p = jnp.zeros((1, hp), jnp.float32).at[:, :hidden].set(
        b1.reshape(1, hidden).astype(jnp.float32))
    w2p = jnp.zeros((hp, op), matmul_dtype).at[:hidden, :out_size].set(
        w2.astype(matmul_dtype))
    b2p = jnp.zeros((1, op), jnp.float32).at[:, :out_size].set(
        b2.reshape(1, out_size).astype(jnp.float32))
    return w1p, b1p, w2p, b2p


def linear_qnet_forward(x, w1p, b1p, w2p, b2p, *, output_size=None,
                        tile_m=512, matmul_dtype=jnp.bfloat16):
    """x: (B, input_size). Padded params from `prepare_params`.

    Batch is tiled over a 1-D "parallel" grid; weights/biases stay
    VMEM-resident across all grid steps, only x/out tiles stream from HBM.
    """
    batch, in_size = x.shape
    assert w1p.shape[0] == in_size
    hp = w1p.shape[1]
    op = w2p.shape[1]
    if output_size is None:
        output_size = op

    # Batch tile: large enough to amortize per-step overhead, small enough
    # that double-buffered x/out tiles stay far under v7x's 64 MiB VMEM.
    tm = min(tile_m, _round_up(batch, 8))
    bp = _round_up(batch, tm)

    xk = x.astype(matmul_dtype)
    if bp != batch:
        xk = jnp.zeros((bp, in_size), matmul_dtype).at[:batch].set(xk)

    out = pl.pallas_call(
        qnet_kernel,
        out_shape=jax.ShapeDtypeStruct((bp, op), jnp.float32),
        grid_spec=pltpu.PrefetchScalarGridSpec(
            num_scalar_prefetch=0,
            grid=(bp // tm,),
            in_specs=[
                pl.BlockSpec((tm, in_size), lambda i: (i, 0)),   # x: streamed
                pl.BlockSpec((in_size, hp), lambda i: (0, 0)),   # W1: resident
                pl.BlockSpec((1, hp), lambda i: (0, 0)),         # b1: resident
                pl.BlockSpec((hp, op), lambda i: (0, 0)),        # W2: resident
                pl.BlockSpec((1, op), lambda i: (0, 0)),         # b2: resident
            ],
            out_specs=pl.BlockSpec((tm, op), lambda i: (i, 0)),  # lane-dense
        ),
        compiler_params=pltpu.CompilerParams(
            dimension_semantics=("parallel",)),  # megacore split on v7x
    )(xk, w1p, b1p, w2p, b2p)

    # Strip batch padding and the lane padding of the output features.
    return out[:batch, :output_size]


def init_params(key, input_size, hidden_size, output_size):
    """Deterministic init mimicking torch.nn.Linear's U(-1/sqrt(fan_in), +)."""
    k1, k2, k3, k4 = jax.random.split(key, 4)
    lim1 = 1.0 / jnp.sqrt(jnp.float32(input_size))
    lim2 = 1.0 / jnp.sqrt(jnp.float32(hidden_size))
    w1 = jax.random.uniform(k1, (input_size, hidden_size), jnp.float32, -lim1, lim1)
    b1 = jax.random.uniform(k2, (1, hidden_size), jnp.float32, -lim1, lim1)
    w2 = jax.random.uniform(k3, (hidden_size, output_size), jnp.float32, -lim2, lim2)
    b2 = jax.random.uniform(k4, (1, output_size), jnp.float32, -lim2, lim2)
    return w1, b1, w2, b2


if __name__ == "__main__":
    # Small shapes consistent with the snake Q-net: Linear_QNet(11, hidden, 3)
    batch, input_size, hidden_size, output_size = 8, 11, 32, 3

    key = jax.random.PRNGKey(0)
    kx, kp = jax.random.split(key)
    x = jax.random.normal(kx, (batch, input_size), jnp.float32)
    w1, b1, w2, b2 = init_params(kp, input_size, hidden_size, output_size)

    # One-time parameter prep (padding to 128 lanes + bf16 cast for the MXU).
    w1p, b1p, w2p, b2p = prepare_params(w1, b1, w2, b2, matmul_dtype=jnp.bfloat16)

    out = linear_qnet_forward(x, w1p, b1p, w2p, b2p,
                              output_size=output_size,
                              matmul_dtype=jnp.bfloat16)
    out = jax.block_until_ready(out)

    # Pure-JAX reference using the same one-time bf16 rounding of matmul inputs.
    xr = x.astype(jnp.bfloat16).astype(jnp.float32)
    w1r = w1.astype(jnp.bfloat16).astype(jnp.float32)
    w2r = w2.astype(jnp.bfloat16).astype(jnp.float32)
    h = jnp.maximum(xr @ w1r + b1, 0.0)
    ref = h.astype(jnp.bfloat16).astype(jnp.float32) @ w2r + b2

    assert out.shape == (batch, output_size)
    assert jnp.allclose(out, ref, atol=1e-2, rtol=1e-2)

    print("KERNEL_OK")
</pallas_src>

<mosaic_0001>
module attributes {stable_mosaic.version = 11 : i64} {
  func.func @qnet_kernel(%arg0: i32, %arg1: memref<8x11xbf16, #tpu.memory_space<vmem>>, %arg2: memref<11x128xbf16, #tpu.memory_space<vmem>>, %arg3: memref<1x128xf32, #tpu.memory_space<vmem>>, %arg4: memref<128x128xbf16, #tpu.memory_space<vmem>>, %arg5: memref<1x128xf32, #tpu.memory_space<vmem>>, %arg6: memref<8x128xf32, #tpu.memory_space<vmem>>) attributes {dimension_semantics = [#tpu.dimension_semantics<parallel>], iteration_bounds = array<i64: 1>, scalar_prefetch = 0 : i64, scratch_operands = 0 : i64, tpu.core_type = #tpu.core_type<tc>, window_params = [{transform_indices = @transform_0, window_bounds = array<i64: 8, 11>}, {pipeline_mode = #tpu.pipeline_mode<synchronous>, transform_indices = @transform_1, window_bounds = array<i64: 11, 128>}, {pipeline_mode = #tpu.pipeline_mode<synchronous>, transform_indices = @transform_2, window_bounds = array<i64: 1, 128>}, {pipeline_mode = #tpu.pipeline_mode<synchronous>, transform_indices = @transform_3, window_bounds = array<i64: 128, 128>}, {pipeline_mode = #tpu.pipeline_mode<synchronous>, transform_indices = @transform_4, window_bounds = array<i64: 1, 128>}, {transform_indices = @transform_5, window_bounds = array<i64: 8, 128>}]} {
    %c0 = arith.constant 0 : index
    %c0_0 = arith.constant 0 : index
    %0 = vector.load %arg1[%c0, %c0_0] : memref<8x11xbf16, #tpu.memory_space<vmem>>, vector<8x11xbf16>
    %c0_1 = arith.constant 0 : index
    %c0_2 = arith.constant 0 : index
    %1 = vector.load %arg2[%c0_1, %c0_2] : memref<11x128xbf16, #tpu.memory_space<vmem>>, vector<11x128xbf16>
    %cst = arith.constant dense<0.000000e+00> : vector<8x128xf32>
    %2 = tpu.matmul %0, %1, %cst {dimension_numbers = #tpu.dot_dimension_numbers<[1], [0], [0], [1], [0, 0, 1, 1], [], []>} : vector<8x11xbf16>, vector<11x128xbf16>, vector<8x128xf32> -> vector<8x128xf32>
    %c0_3 = arith.constant 0 : index
    %c0_4 = arith.constant 0 : index
    %3 = vector.load %arg3[%c0_3, %c0_4] : memref<1x128xf32, #tpu.memory_space<vmem>>, vector<1x128xf32>
    %4 = vector.broadcast %3 : vector<1x128xf32> to vector<8x128xf32>
    %5 = arith.addf %2, %4 : vector<8x128xf32>
    %cst_5 = arith.constant 0.000000e+00 : f32
    %6 = vector.broadcast %cst_5 : f32 to vector<8x128xf32>
    %7 = arith.maximumf %5, %6 : vector<8x128xf32>
    %8 = arith.truncf %7 : vector<8x128xf32> to vector<8x128xbf16>
    %c0_6 = arith.constant 0 : index
    %c0_7 = arith.constant 0 : index
    %9 = vector.load %arg4[%c0_6, %c0_7] : memref<128x128xbf16, #tpu.memory_space<vmem>>, vector<128x128xbf16>
    %cst_8 = arith.constant dense<0.000000e+00> : vector<8x128xf32>
    %10 = tpu.matmul %8, %9, %cst_8 {dimension_numbers = #tpu.dot_dimension_numbers<[1], [0], [0], [1], [0, 0, 1, 1], [], []>} : vector<8x128xbf16>, vector<128x128xbf16>, vector<8x128xf32> -> vector<8x128xf32>
    %c0_9 = arith.constant 0 : index
    %c0_10 = arith.constant 0 : index
    %11 = vector.load %arg5[%c0_9, %c0_10] : memref<1x128xf32, #tpu.memory_space<vmem>>, vector<1x128xf32>
    %12 = vector.broadcast %11 : vector<1x128xf32> to vector<8x128xf32>
    %13 = arith.addf %10, %12 : vector<8x128xf32>
    %c0_11 = arith.constant 0 : index
    %c0_12 = arith.constant 0 : index
    %14 = vector.load %arg6[%c0_11, %c0_12] : memref<8x128xf32, #tpu.memory_space<vmem>>, vector<8x128xf32>
    tpu.vector_store %arg6[%c0_11, %c0_12], %13 {strides = array<i32>} : memref<8x128xf32, #tpu.memory_space<vmem>>, vector<8x128xf32>,
    return
  }
  func.func @transform_0(%arg0: i32) -> (i32, i32) {
    %c0_i32 = arith.constant 0 : i32
    %c0_i32_0 = arith.constant 0 : i32
    return %arg0, %c0_i32 : i32, i32
  }
  func.func @transform_1(%arg0: i32) -> (i32, i32) {
    %c0_i32 = arith.constant 0 : i32
    %c0_i32_0 = arith.constant 0 : i32
    %c0_i32_1 = arith.constant 0 : i32
    return %c0_i32, %c0_i32_0 : i32, i32
  }
  func.func @transform_2(%arg0: i32) -> (i32, i32) {
    %c0_i32 = arith.constant 0 : i32
    %c0_i32_0 = arith.constant 0 : i32
    %c0_i32_1 = arith.constant 0 : i32
    return %c0_i32, %c0_i32_0 : i32, i32
  }
  func.func @transform_3(%arg0: i32) -> (i32, i32) {
    %c0_i32 = arith.constant 0 : i32
    %c0_i32_0 = arith.constant 0 : i32
    %c0_i32_1 = arith.constant 0 : i32
    return %c0_i32, %c0_i32_0 : i32, i32
  }
  func.func @transform_4(%arg0: i32) -> (i32, i32) {
    %c0_i32 = arith.constant 0 : i32
    %c0_i32_0 = arith.constant 0 : i32
    %c0_i32_1 = arith.constant 0 : i32
    return %c0_i32, %c0_i32_0 : i32, i32
  }
  func.func @transform_5(%arg0: i32) -> (i32, i32) {
    %c0_i32 = arith.constant 0 : i32
    %c0_i32_0 = arith.constant 0 : i32
    return %arg0, %c0_i32 : i32, i32
  }
}

</mosaic_0001>

<llo_original>
// kernel: tpu_custom_call.1
$region0: #{tpu_custom_call.1}
  #allocation0 [shape = 'u32[]', space=smem, size = 0x4, offset = 0x4, fixed_abs, tag = 'smem constant byte address 0x4 - core index']
  #allocation1 [shape = 'u32[72,128]{1,0:T(1,128)}', space=vmem, size = 0x9000, scoped, tag = 'internal scratch']
  %s0 = inlined_call_operand.hbm [shape: bf16[8,11], index: 0, kind: input, shape index: {}]
  %s1 = inlined_call_operand.hbm [shape: bf16[11,128], index: 1, kind: input, shape index: {}]
  %s2 = inlined_call_operand.vmem [shape: f32[1,128], index: 2, kind: input, shape index: {}]
  %s3 = inlined_call_operand.hbm [shape: bf16[128,128], index: 3, kind: input, shape index: {}]
  %s4 = inlined_call_operand.vmem [shape: f32[1,128], index: 4, kind: input, shape index: {}]
  %s5 = inlined_call_operand.hbm [shape: f32[8,128], index: 5, kind: output, shape index: {}]
  %s6 = sld [smem:[#allocation0]]
  $region42: #{tpu_custom_call.1} parent=0
    _
  %s8 = ssub.s32 1, %s6
  %s9 = scalar_select 0, %s8, %s6
  $region1: #{tpu_custom_call.1} parent=0
    #allocation2 [shape = 'u8[2048]{0}', space=vmem, size = 0x800, scoped, tag = 'input window, operand 0, single buffered']
    #allocation3 [shape = 's32[1]{0}', space=sflag, size = 0x4, scoped, tag = 'scoped memory for tpu_custom_call.1']
    #allocation4 [shape = 's32[1]{0}', space=sflag, size = 0x4, scoped, tag = 'scoped memory for tpu_custom_call.1']
    #allocation5 [shape = 'u8[4096]{0}', space=vmem, size = 0x1000, scoped, tag = 'input window, operand 1, single buffered']
    #allocation6 [shape = 's32[1]{0}', space=sflag, size = 0x4, scoped, tag = 'scoped memory for tpu_custom_call.1']
    #allocation7 [shape = 'u8[32768]{0}', space=vmem, size = 0x8000, scoped, tag = 'input window, operand 3, single buffered']
    #allocation8 [shape = 'u8[4096]{0}', space=vmem, size = 0x1000, scoped, tag = 'output window, operand 0, single buffered']
    %10 = vsyncpa [#allocation3], 0
    %11 = vsyncpa [#allocation6], 0
    %12 = vsyncpa [#allocation4], 0
    // Predicated region
    $region2: #{tpu_custom_call.1} parent=1 // pred_check
      _
    $region3: #{tpu_custom_call.1} parent=1 // pred_check_branch
      %14 = sbr.rel (0) target = $region5
    $region4: #{tpu_custom_call.1} parent=1 // pred_region
      %16 = vsyncadd [#allocation3], 0
      %s18 = sshll.u32 %s0, 4
      %s19 = int_to_ptr.hbm [resolvable:$true] %s18
      %s20 = sshll.u32 [#allocation2], 4
      %s21 = int_to_ptr.vmem [resolvable:$true] %s20
      %23 = dma.hbm_to_vmem [thread:$0]  %s19, 64, %s21, [#allocation3]
    $region5: #{tpu_custom_call.1} parent=1 // pred_fallthru
      _
    // Predicated region
    $region6: #{tpu_custom_call.1} parent=1 // pred_check
      _
    $region7: #{tpu_custom_call.1} parent=1 // pred_check_branch
      %25 = sbr.rel (0) target = $region9
    $region8: #{tpu_custom_call.1} parent=1 // pred_region
      %27 = vsyncadd [#allocation6], 0
      %s28 = sshll.u32 %s1, 4
      %s29 = int_to_ptr.hbm [resolvable:$true] %s28
      %s30 = sshll.u32 [#allocation5], 4
      %s31 = int_to_ptr.vmem [resolvable:$true] %s30
      %36 = dma.hbm_to_vmem [thread:$0]  %s29, 128, %s31, [#allocation6], 64, 64, 4
    $region9: #{tpu_custom_call.1} parent=1 // pred_fallthru
      _
    // Predicated region
    $region10: #{tpu_custom_call.1} parent=1 // pred_check
      _
    $region11: #{tpu_custom_call.1} parent=1 // pred_check_branch
      %38 = sbr.rel (0) target = $region13
    $region12: #{tpu_custom_call.1} parent=1 // pred_region
      _
    $region13: #{tpu_custom_call.1} parent=1 // pred_fallthru
      _
    // Predicated region
    $region14: #{tpu_custom_call.1} parent=1 // pred_check
      _
    $region15: #{tpu_custom_call.1} parent=1 // pred_check_branch
      %40 = sbr.rel (0) target = $region17
    $region16: #{tpu_custom_call.1} parent=1 // pred_region
      %42 = vsyncadd [#allocation6], 0
      %s43 = sshll.u32 %s3, 4
      %s44 = int_to_ptr.hbm [resolvable:$true] %s43
      %s45 = sshll.u32 [#allocation7], 4
      %s46 = int_to_ptr.vmem [resolvable:$true] %s45
      %51 = dma.hbm_to_vmem [thread:$0]  %s44, 1024, %s46, [#allocation6], 64, 64, 4
    $region17: #{tpu_custom_call.1} parent=1 // pred_fallthru
      _
    // Predicated region
    $region18: #{tpu_custom_call.1} parent=1 // pred_check
      _
    $region19: #{tpu_custom_call.1} parent=1 // pred_check_branch
      %53 = sbr.rel (0) target = $region21
    $region20: #{tpu_custom_call.1} parent=1 // pred_region
      _
    $region21: #{tpu_custom_call.1} parent=1 // pred_fallthru
      _
    // Predicated region
    $region22: #{tpu_custom_call.1} parent=1 // pred_check
      _
    $region23: #{tpu_custom_call.1} parent=1 // pred_check_branch
      %55 = sbr.rel (0) target = $region25
    $region24: #{tpu_custom_call.1} parent=1 // pred_region
      %57 = dma.done [#allocation3], 64
    $region25: #{tpu_custom_call.1} parent=1 // pred_fallthru
      _
    // Predicated region
    $region26: #{tpu_custom_call.1} parent=1 // pred_check
      _
    $region27: #{tpu_custom_call.1} parent=1 // pred_check_branch
      %59 = sbr.rel (0) target = $region29
    $region28: #{tpu_custom_call.1} parent=1 // pred_region
      %61 = dma.done [#allocation6], 128
    $region29: #{tpu_custom_call.1} parent=1 // pred_fallthru
      _
    // Predicated region
    $region30: #{tpu_custom_call.1} parent=1 // pred_check
      _
    $region31: #{tpu_custom_call.1} parent=1 // pred_check_branch
      %63 = sbr.rel (0) target = $region33
    $region32: #{tpu_custom_call.1} parent=1 // pred_region
      %65 = dma.done [#allocation6], 1024
    $region33: #{tpu_custom_call.1} parent=1 // pred_fallthru
      _
    %v67 = vld [vmem:[#allocation2] sm:$0xf]
    %v68 = vld [vmem:[#allocation5] sm:$0xf]
    %v69 = vld [vmem:[#allocation5 + $0x4] sm:$0x3]
    %v70 = vld [vmem:[%s2] sm:$0x1]
    %v72 = vperm.slane %v70, 0
    %v76 = vunpack.c.l.b16 %v68
    %v77 = vunpack.c.l.b16 %v69
    %v78 = vpack.c.b16 %v77, %v76
    %vm79 = vcmask 89088
    %v81 = vsel %vm79, %v67, 0
    %vm83 = vcmask 1044480
    %vm84 = vcmask 1045504
    %v85 = vsel %vm83, 4294967295, 65535
    %v86 = vsel %vm84, %v85, 0
    %v88 = vand.u32 %v78, %v86
    %90 = vmatpush.bf16.msra.mxu0 0
    %91 = vmatpush.bf16.msra.mxu0 0
    %92 = vmatpush.bf16.msra.mxu0 0
    %93 = vmatpush.bf16.msra.mxu0 0
    %94 = vmatpush.bf16.msra.mxu0 0
    %95 = vmatpush.bf16.msra.mxu0 0
    %96 = vmatpush.bf16.msra.mxu0 0
    %97 = vmatpush.bf16.msra.mxu0 %v88
    %98 = vmatmul.bf16.gmra.mxu0 %v81
    %v99 = vpop.f32.mrf.mxu0
    %v100 = vadd.f32 %v72, %v99
    %v101 = vpop.f32.mrf.mxu0
    %102 = vdwg.mxu0
    %v103 = vmax.f32 %v100, 0.0
    %v104 = vpack.c.bf16 %v103, %v103
    %v105 = vld [vmem:[#allocation7] sm:$0xf]
    %v106 = vld [vmem:[#allocation7 + $0x4] sm:$0xf]
    %v107 = vld [vmem:[#allocation7 + $0x8] sm:$0xf]
    %v108 = vld [vmem:[#allocation7 + $0xc] sm:$0xf]
    %v109 = vld [vmem:[#allocation7 + $0x10] sm:$0xf]
    %v110 = vld [vmem:[#allocation7 + $0x14] sm:$0xf]
    %v111 = vld [vmem:[#allocation7 + $0x18] sm:$0xf]
    %v112 = vld [vmem:[#allocation7 + $0x1c] sm:$0xf]
    %v113 = vld [vmem:[#allocation7 + $0x20] sm:$0xf]
    %v114 = vld [vmem:[#allocation7 + $0x24] sm:$0xf]
    %v115 = vld [vmem:[#allocation7 + $0x28] sm:$0xf]
    %v116 = vld [vmem:[#allocation7 + $0x2c] sm:$0xf]
    %v117 = vld [vmem:[#allocation7 + $0x30] sm:$0xf]
    %v118 = vld [vmem:[#allocation7 + $0x34] sm:$0xf]
    %v119 = vld [vmem:[#allocation7 + $0x38] sm:$0xf]
    %v120 = vld [vmem:[#allocation7 + $0x3c] sm:$0xf]
    %v121 = vld [vmem:[%s4] sm:$0x1]
    %v123 = vperm.slane %v121, 0
    %v141 = vunpack.c.l.b16 %v105
    %v142 = vunpack.c.l.b16 %v106
    %v143 = vunpack.c.l.b16 %v107
    %v144 = vunpack.c.l.b16 %v108
    %v145 = vunpack.c.l.b16 %v109
    %v146 = vunpack.c.l.b16 %v110
    %v147 = vunpack.c.l.b16 %v111
    %v148 = vunpack.c.l.b16 %v112
    %v149 = vunpack.c.l.b16 %v113
    %v150 = vunpack.c.l.b16 %v114
    %v151 = vunpack.c.l.b16 %v115
    %v152 = vunpack.c.l.b16 %v116
    %v153 = vunpack.c.l.b16 %v117
    %v154 = vunpack.c.l.b16 %v118
    %v155 = vunpack.c.l.b16 %v119
    %v156 = vunpack.c.l.b16 %v120
    %v157 = vpack.c.b16 %v142, %v141
    %v158 = vpack.c.b16 %v144, %v143
    %v159 = vpack.c.b16 %v146, %v145
    %v160 = vpack.c.b16 %v148, %v147
    %v161 = vpack.c.b16 %v150, %v149
    %v162 = vpack.c.b16 %v152, %v151
    %v163 = vpack.c.b16 %v154, %v153
    %v164 = vpack.c.b16 %v156, %v155
    %173 = vmatpush.bf16.msra.mxu0 %v164
    %174 = vmatpush.bf16.msra.mxu0 %v163
    %175 = vmatpush.bf16.msra.mxu0 %v162
    %176 = vmatpush.bf16.msra.mxu0 %v161
    %177 = vmatpush.bf16.msra.mxu0 %v160
    %178 = vmatpush.bf16.msra.mxu0 %v159
    %179 = vmatpush.bf16.msra.mxu0 %v158
    %180 = vmatpush.bf16.msra.mxu0 %v157
    %181 = vmatmul.bf16.gmra.mxu0 %v104
    %v182 = vpop.f32.mrf.mxu0
    %v183 = vadd.f32 %v123, %v182
    %v184 = vpop.f32.mrf.mxu0
    %185 = vdwg.mxu0
    %186 = vst [vmem:[#allocation8] sm:$0xff] %v183
    // Predicated region
    $region34: #{tpu_custom_call.1} parent=1 // pred_check
      _
    $region35: #{tpu_custom_call.1} parent=1 // pred_check_branch
      %188 = sbr.rel (0) target = $region37
    $region36: #{tpu_custom_call.1} parent=1 // pred_region
      %190 = vsyncadd [#allocation4], 0
      %s192 = sshll.u32 [#allocation8], 4
      %s193 = int_to_ptr.vmem [resolvable:$true] %s192
      %s194 = sshll.u32 %s5, 4
      %s195 = int_to_ptr.hbm [resolvable:$true] %s194
      %197 = dma.vmem_to_hbm [thread:$0]  %s193, 128, %s195, [#allocation4]
    $region37: #{tpu_custom_call.1} parent=1 // pred_fallthru
      _
    // Predicated region
    $region38: #{tpu_custom_call.1} parent=1 // pred_check
      _
    $region39: #{tpu_custom_call.1} parent=1 // pred_check_branch
      %199 = sbr.rel (0) target = $region41
    $region40: #{tpu_custom_call.1} parent=1 // pred_region
      %201 = dma.done [#allocation4], 128
    $region41: #{tpu_custom_call.1} parent=1 // pred_fallthru
      _
    %202 = vsyncpa [#allocation3], 1
    %203 = vsyncpa [#allocation6], 1
    %204 = vsyncpa [#allocation4], 1

</llo_original>
